<compile_context>
chip_gen: v6e
topology: v6e:2x2x1
jax: 0.10.0
libtpu: 0.0.40
codegen_flags: <defaults>
</compile_context>

<pallas_src>
import jax
import jax.numpy as jnp
from jax.experimental import pallas as pl
from jax.experimental.pallas import tpu as pltpu


def make_lstm_kernel(*, T, chunk_t, B_pad, H):
    """Builds the chunked LSTM kernel with static shape/time constants baked in."""
    needs_tail_mask = (T % chunk_t) != 0

    def kernel(x_ref, wx_ref, wh_ref, b_ref, h_out_ref, xg_ref, h_ref, c_ref):
        # x_ref  : (chunk_t*B_pad, D)  time-major rows, row = t_local*B_pad + b
        # wx_ref : (D, 4H)   W_ih^T
        # wh_ref : (H, 4H)   W_hh^T
        # b_ref  : (1, 4H)   b_ih + b_hh
        # h_out  : (B_pad, H)
        # xg_ref : (chunk_t*B_pad, 4H) scratch (hoisted input projection)
        # h_ref/c_ref : (B_pad, H) scratch carried across grid steps
        ci = pl.program_id(0)

        @pl.when(ci == 0)
        def _():
            h_ref[...] = jnp.zeros_like(h_ref)
            c_ref[...] = jnp.zeros_like(c_ref)

        # (1) Hoisted input projection: one MXU-friendly tall matmul per chunk.
        xg_ref[...] = (
            jnp.dot(x_ref[...], wx_ref[...], preferred_element_type=jnp.float32)
            + b_ref[...]
        )

        wh = wh_ref[...]                                   # (H, 4H), resident

        # (2) Hoisted activation lane vectors: sigmoid(z) = 0.5*tanh(0.5*z) + 0.5,
        #     so ONE tanh pass covers the whole (B_pad, 4H) gate vreg.
        lane = jax.lax.broadcasted_iota(jnp.int32, (B_pad, 4 * H), 1)
        is_g = (lane >= 2 * H) & (lane < 3 * H)            # tanh ("g") gate lanes
        scale = jnp.where(is_g, 1.0, 0.5).astype(jnp.float32)
        offset = jnp.where(is_g, 0.0, 0.5).astype(jnp.float32)

        def step(t, carry):
            h_prev, c_prev = carry
            row = pl.multiple_of(t * B_pad, B_pad)         # sublane-aligned slice
            gates = xg_ref[pl.ds(row, B_pad), :] + jnp.dot(
                h_prev, wh, preferred_element_type=jnp.float32)      # (B_pad, 4H)
            act = jnp.tanh(gates * scale) * scale + offset            # single EUP pass
            i_g = act[:, 0 * H:1 * H]
            f_g = act[:, 1 * H:2 * H]
            g_g = act[:, 2 * H:3 * H]
            o_g = act[:, 3 * H:4 * H]
            c_new = f_g * c_prev + i_g * g_g
            h_new = o_g * jnp.tanh(c_new)
            if needs_tail_mask:
                # Only emitted when T is not a multiple of chunk_t: freeze the state
                # on zero-padded trailing timesteps.
                valid = (ci * chunk_t + t) < T
                h_new = jnp.where(valid, h_new, h_prev)
                c_new = jnp.where(valid, c_new, c_prev)
            return h_new, c_new

        h_fin, c_fin = jax.lax.fori_loop(
            0, chunk_t, step, (h_ref[...], c_ref[...]), unroll=min(8, chunk_t))

        h_ref[...] = h_fin
        c_ref[...] = c_fin
        h_out_ref[...] = h_fin.astype(h_out_ref.dtype)

    return kernel


def lstm_extractor(opt, adj, w_ih, w_hh, b_ih, b_hh, *, chunk_t=128):
    """Pallas equivalent of LSTMExtractor.forward(opt, adj)."""
    x = jnp.concatenate([opt, adj], axis=-1).astype(jnp.float32)   # (B, T, D)
    B, T, D = x.shape
    H = w_hh.shape[1]

    B_pad = ((B + 7) // 8) * 8
    chunk_t = max(1, min(chunk_t, T))
    n_chunks = pl.cdiv(T, chunk_t)
    T_pad = n_chunks * chunk_t

    # Layout plumbing (wrapper side): time-major, flattened (t, b) rows so the
    # kernel never reshapes. Row = t * B_pad + b.
    x_tb = jnp.transpose(x, (1, 0, 2))                              # (T, B, D)
    x_tb = jnp.pad(x_tb, ((0, T_pad - T), (0, B_pad - B), (0, 0)))
    x_flat = x_tb.reshape(T_pad * B_pad, D)

    wx = jnp.transpose(w_ih).astype(jnp.float32)                    # (D, 4H)
    wh = jnp.transpose(w_hh).astype(jnp.float32)                    # (H, 4H)
    b = (b_ih + b_hh).astype(jnp.float32).reshape(1, 4 * H)         # (1, 4H)

    kernel = make_lstm_kernel(T=T, chunk_t=chunk_t, B_pad=B_pad, H=H)

    grid_spec = pltpu.PrefetchScalarGridSpec(
        num_scalar_prefetch=0,
        grid=(n_chunks,),
        in_specs=[
            pl.BlockSpec((chunk_t * B_pad, D), lambda i: (i, 0)),   # streamed x chunks
            pl.BlockSpec((D, 4 * H), lambda i: (0, 0)),             # resident weights
            pl.BlockSpec((H, 4 * H), lambda i: (0, 0)),
            pl.BlockSpec((1, 4 * H), lambda i: (0, 0)),
        ],
        out_specs=pl.BlockSpec((B_pad, H), lambda i: (0, 0)),       # resident accumulator
        scratch_shapes=[
            pltpu.VMEM((chunk_t * B_pad, 4 * H), jnp.float32),      # hoisted x-projection
            pltpu.VMEM((B_pad, H), jnp.float32),                    # h carry
            pltpu.VMEM((B_pad, H), jnp.float32),                    # c carry
        ],
    )

    hidden = pl.pallas_call(
        kernel,
        out_shape=jax.ShapeDtypeStruct((B_pad, H), jnp.float32),
        grid_spec=grid_spec,
        compiler_params=pltpu.CompilerParams(
            dimension_semantics=("arbitrary",),          # time recurrence is serial
            vmem_limit_bytes=32 * 1024 * 1024,           # safe on v5e/v6e/v7x
        ),
    )(x_flat, wx, wh, b)

    hidden = hidden[:B]
    # PyTorch: hidden has shape (num_layers=1, B, H); .squeeze() -> (B, H)
    return jnp.squeeze(hidden)


def lstm_extractor_ref(opt, adj, w_ih, w_hh, b_ih, b_hh):
    """Pure-JAX reference matching torch.nn.LSTM semantics (num_layers=1)."""
    x = jnp.concatenate([opt, adj], axis=-1).astype(jnp.float32)
    B, T, _ = x.shape
    H = w_hh.shape[1]
    h = jnp.zeros((B, H), jnp.float32)
    c = jnp.zeros((B, H), jnp.float32)
    for t in range(T):
        g = x[:, t, :] @ w_ih.T + b_ih + h @ w_hh.T + b_hh
        i = jax.nn.sigmoid(g[:, :H])
        f = jax.nn.sigmoid(g[:, H:2 * H])
        gg = jnp.tanh(g[:, 2 * H:3 * H])
        o = jax.nn.sigmoid(g[:, 3 * H:])
        c = f * c + i * gg
        h = o * jnp.tanh(c)
    return jnp.squeeze(h)


if __name__ == "__main__":
    key = jax.random.PRNGKey(0)
    B, T = 2, 8
    d_opt, d_adj = 16, 16
    D = d_opt + d_adj            # input_dim = 32
    H = 32                       # latent_dim

    k_opt, k_adj, k_wih, k_whh, k_bih, k_bhh = jax.random.split(key, 6)
    opt = jax.random.normal(k_opt, (B, T, d_opt), dtype=jnp.float32)
    adj = jax.random.normal(k_adj, (B, T, d_adj), dtype=jnp.float32)

    # PyTorch LSTM param init: U(-1/sqrt(H), 1/sqrt(H)); shapes (4H, D), (4H, H), (4H,), (4H,)
    bound = 1.0 / jnp.sqrt(jnp.float32(H))
    w_ih = jax.random.uniform(k_wih, (4 * H, D), jnp.float32, -bound, bound)
    w_hh = jax.random.uniform(k_whh, (4 * H, H), jnp.float32, -bound, bound)
    b_ih = jax.random.uniform(k_bih, (4 * H,), jnp.float32, -bound, bound)
    b_hh = jax.random.uniform(k_bhh, (4 * H,), jnp.float32, -bound, bound)

    out = jax.block_until_ready(lstm_extractor(opt, adj, w_ih, w_hh, b_ih, b_hh))
    ref = jax.block_until_ready(lstm_extractor_ref(opt, adj, w_ih, w_hh, b_ih, b_hh))

    assert out.shape == (B, H), out.shape
    assert jnp.allclose(out, ref, atol=1e-5, rtol=1e-5), float(jnp.max(jnp.abs(out - ref)))
    print("KERNEL_OK")
</pallas_src>

<mosaic_0001>
module attributes {stable_mosaic.version = 11 : i64} {
  func.func @kernel(%arg0: i32, %arg1: memref<64x32xf32, #tpu.memory_space<vmem>>, %arg2: memref<32x128xf32, #tpu.memory_space<vmem>>, %arg3: memref<32x128xf32, #tpu.memory_space<vmem>>, %arg4: memref<1x128xf32, #tpu.memory_space<vmem>>, %arg5: memref<8x32xf32, #tpu.memory_space<vmem>>, %arg6: memref<64x128xf32, #tpu.memory_space<vmem>>, %arg7: memref<8x32xf32, #tpu.memory_space<vmem>>, %arg8: memref<8x32xf32, #tpu.memory_space<vmem>>) attributes {dimension_semantics = [#tpu.dimension_semantics<arbitrary>], iteration_bounds = array<i64: 1>, scalar_prefetch = 0 : i64, scratch_operands = 3 : i64, tpu.core_type = #tpu.core_type<tc>, window_params = [{transform_indices = @transform_0, window_bounds = array<i64: 64, 32>}, {pipeline_mode = #tpu.pipeline_mode<synchronous>, transform_indices = @transform_1, window_bounds = array<i64: 32, 128>}, {pipeline_mode = #tpu.pipeline_mode<synchronous>, transform_indices = @transform_2, window_bounds = array<i64: 32, 128>}, {pipeline_mode = #tpu.pipeline_mode<synchronous>, transform_indices = @transform_3, window_bounds = array<i64: 1, 128>}, {pipeline_mode = #tpu.pipeline_mode<synchronous>, transform_indices = @transform_4, window_bounds = array<i64: 8, 32>}]} {
    %c0_i32 = arith.constant 0 : i32
    %0 = arith.cmpi eq, %arg0, %c0_i32 : i32
    %1 = arith.extui %0 : i1 to i32
    %c0_i32_0 = arith.constant 0 : i32
    %2 = arith.cmpi ne, %1, %c0_i32_0 : i32
    scf.if %2 {
      %cst_49 = arith.constant 0.000000e+00 : f32
      %180 = vector.broadcast %cst_49 : f32 to vector<8x32xf32>
      %c0_50 = arith.constant 0 : index
      %c0_51 = arith.constant 0 : index
      %181 = vector.load %arg7[%c0_50, %c0_51] : memref<8x32xf32, #tpu.memory_space<vmem>>, vector<8x32xf32>
      tpu.vector_store %arg7[%c0_50, %c0_51], %180 {strides = array<i32>} : memref<8x32xf32, #tpu.memory_space<vmem>>, vector<8x32xf32>,
      %cst_52 = arith.constant 0.000000e+00 : f32
      %182 = vector.broadcast %cst_52 : f32 to vector<8x32xf32>
      %c0_53 = arith.constant 0 : index
      %c0_54 = arith.constant 0 : index
      %183 = vector.load %arg8[%c0_53, %c0_54] : memref<8x32xf32, #tpu.memory_space<vmem>>, vector<8x32xf32>
      tpu.vector_store %arg8[%c0_53, %c0_54], %182 {strides = array<i32>} : memref<8x32xf32, #tpu.memory_space<vmem>>, vector<8x32xf32>,
    } else {
    }
    %c0 = arith.constant 0 : index
    %c0_1 = arith.constant 0 : index
    %3 = vector.load %arg1[%c0, %c0_1] : memref<64x32xf32, #tpu.memory_space<vmem>>, vector<64x32xf32>
    %c0_2 = arith.constant 0 : index
    %c0_3 = arith.constant 0 : index
    %4 = vector.load %arg2[%c0_2, %c0_3] : memref<32x128xf32, #tpu.memory_space<vmem>>, vector<32x128xf32>
    %cst = arith.constant dense<0.000000e+00> : vector<64x128xf32>
    %5 = tpu.matmul %3, %4, %cst {dimension_numbers = #tpu.dot_dimension_numbers<[1], [0], [0], [1], [0, 0, 1, 1], [], []>} : vector<64x32xf32>, vector<32x128xf32>, vector<64x128xf32> -> vector<64x128xf32>
    %c0_4 = arith.constant 0 : index
    %c0_5 = arith.constant 0 : index
    %6 = vector.load %arg4[%c0_4, %c0_5] : memref<1x128xf32, #tpu.memory_space<vmem>>, vector<1x128xf32>
    %7 = vector.broadcast %6 : vector<1x128xf32> to vector<64x128xf32>
    %8 = arith.addf %5, %7 : vector<64x128xf32>
    %c0_6 = arith.constant 0 : index
    %c0_7 = arith.constant 0 : index
    %9 = vector.load %arg6[%c0_6, %c0_7] : memref<64x128xf32, #tpu.memory_space<vmem>>, vector<64x128xf32>
    tpu.vector_store %arg6[%c0_6, %c0_7], %8 {strides = array<i32>} : memref<64x128xf32, #tpu.memory_space<vmem>>, vector<64x128xf32>,
    %c0_8 = arith.constant 0 : index
    %c0_9 = arith.constant 0 : index
    %10 = vector.load %arg3[%c0_8, %c0_9] : memref<32x128xf32, #tpu.memory_space<vmem>>, vector<32x128xf32>
    %11 = tpu.iota {dimensions = array<i32: 1>} : vector<8x128xi32>
    %c64_i32 = arith.constant 64 : i32
    %12 = vector.broadcast %c64_i32 : i32 to vector<8x128xi32>
    %13 = arith.cmpi sge, %11, %12 : vector<8x128xi32>
    %c96_i32 = arith.constant 96 : i32
    %14 = vector.broadcast %c96_i32 : i32 to vector<8x128xi32>
    %15 = arith.cmpi slt, %11, %14 : vector<8x128xi32>
    %16 = arith.andi %13, %15 : vector<8x128xi1>
    %cst_10 = arith.constant 1.000000e+00 : f32
    %cst_11 = arith.constant 5.000000e-01 : f32
    %17 = vector.broadcast %cst_10 : f32 to vector<8x128xf32>
    %18 = vector.broadcast %cst_11 : f32 to vector<8x128xf32>
    %19 = arith.select %16, %17, %18 : vector<8x128xi1>, vector<8x128xf32>
    %cst_12 = arith.constant 0.000000e+00 : f32
    %cst_13 = arith.constant 5.000000e-01 : f32
    %20 = vector.broadcast %cst_12 : f32 to vector<8x128xf32>
    %21 = vector.broadcast %cst_13 : f32 to vector<8x128xf32>
    %22 = arith.select %16, %20, %21 : vector<8x128xi1>, vector<8x128xf32>
    %c0_14 = arith.constant 0 : index
    %c0_15 = arith.constant 0 : index
    %23 = vector.load %arg7[%c0_14, %c0_15] : memref<8x32xf32, #tpu.memory_space<vmem>>, vector<8x32xf32>
    %c0_16 = arith.constant 0 : index
    %c0_17 = arith.constant 0 : index
    %24 = vector.load %arg8[%c0_16, %c0_17] : memref<8x32xf32, #tpu.memory_space<vmem>>, vector<8x32xf32>
    %c0_i32_18 = arith.constant 0 : i32
    %c8_i32 = arith.constant 8 : i32
    %25 = arith.muli %c0_i32_18, %c8_i32 : i32
    %26 = tpu.assume_multiple %25, 8 : i32
    %27 = arith.index_cast %26 : i32 to index
    %c0_19 = arith.constant 0 : index
    %28 = vector.load %arg6[%27, %c0_19] : memref<64x128xf32, #tpu.memory_space<vmem>>, vector<8x128xf32>
    %cst_20 = arith.constant dense<0.000000e+00> : vector<8x128xf32>
    %29 = tpu.matmul %23, %10, %cst_20 {dimension_numbers = #tpu.dot_dimension_numbers<[1], [0], [0], [1], [0, 0, 1, 1], [], []>} : vector<8x32xf32>, vector<32x128xf32>, vector<8x128xf32> -> vector<8x128xf32>
    %30 = arith.addf %28, %29 : vector<8x128xf32>
    %31 = arith.mulf %30, %19 : vector<8x128xf32>
    %32 = math.tanh %31 : vector<8x128xf32>
    %33 = arith.mulf %32, %19 : vector<8x128xf32>
    %34 = arith.addf %33, %22 : vector<8x128xf32>
    %35 = vector.extract_strided_slice %34 {offsets = [0, 0], sizes = [8, 32], strides = [1, 1]} : vector<8x128xf32> to vector<8x32xf32>
    %36 = vector.extract_strided_slice %34 {offsets = [0, 32], sizes = [8, 32], strides = [1, 1]} : vector<8x128xf32> to vector<8x32xf32>
    %37 = vector.extract_strided_slice %34 {offsets = [0, 64], sizes = [8, 32], strides = [1, 1]} : vector<8x128xf32> to vector<8x32xf32>
    %38 = vector.extract_strided_slice %34 {offsets = [0, 96], sizes = [8, 32], strides = [1, 1]} : vector<8x128xf32> to vector<8x32xf32>
    %39 = arith.mulf %36, %24 : vector<8x32xf32>
    %40 = arith.mulf %35, %37 : vector<8x32xf32>
    %41 = arith.addf %39, %40 : vector<8x32xf32>
    %42 = math.tanh %41 : vector<8x32xf32>
    %43 = arith.mulf %38, %42 : vector<8x32xf32>
    %c1_i32 = arith.constant 1 : i32
    %c8_i32_21 = arith.constant 8 : i32
    %44 = arith.muli %c1_i32, %c8_i32_21 : i32
    %45 = tpu.assume_multiple %44, 8 : i32
    %46 = arith.index_cast %45 : i32 to index
    %c0_22 = arith.constant 0 : index
    %47 = vector.load %arg6[%46, %c0_22] : memref<64x128xf32, #tpu.memory_space<vmem>>, vector<8x128xf32>
    %cst_23 = arith.constant dense<0.000000e+00> : vector<8x128xf32>
    %48 = tpu.matmul %43, %10, %cst_23 {dimension_numbers = #tpu.dot_dimension_numbers<[1], [0], [0], [1], [0, 0, 1, 1], [], []>} : vector<8x32xf32>, vector<32x128xf32>, vector<8x128xf32> -> vector<8x128xf32>
    %49 = arith.addf %47, %48 : vector<8x128xf32>
    %50 = arith.mulf %49, %19 : vector<8x128xf32>
    %51 = math.tanh %50 : vector<8x128xf32>
    %52 = arith.mulf %51, %19 : vector<8x128xf32>
    %53 = arith.addf %52, %22 : vector<8x128xf32>
    %54 = vector.extract_strided_slice %53 {offsets = [0, 0], sizes = [8, 32], strides = [1, 1]} : vector<8x128xf32> to vector<8x32xf32>
    %55 = vector.extract_strided_slice %53 {offsets = [0, 32], sizes = [8, 32], strides = [1, 1]} : vector<8x128xf32> to vector<8x32xf32>
    %56 = vector.extract_strided_slice %53 {offsets = [0, 64], sizes = [8, 32], strides = [1, 1]} : vector<8x128xf32> to vector<8x32xf32>
    %57 = vector.extract_strided_slice %53 {offsets = [0, 96], sizes = [8, 32], strides = [1, 1]} : vector<8x128xf32> to vector<8x32xf32>
    %58 = arith.mulf %55, %41 : vector<8x32xf32>
    %59 = arith.mulf %54, %56 : vector<8x32xf32>
    %60 = arith.addf %58, %59 : vector<8x32xf32>
    %61 = math.tanh %60 : vector<8x32xf32>
    %62 = arith.mulf %57, %61 : vector<8x32xf32>
    %c2_i32 = arith.constant 2 : i32
    %c8_i32_24 = arith.constant 8 : i32
    %63 = arith.muli %c2_i32, %c8_i32_24 : i32
    %64 = tpu.assume_multiple %63, 8 : i32
    %65 = arith.index_cast %64 : i32 to index
    %c0_25 = arith.constant 0 : index
    %66 = vector.load %arg6[%65, %c0_25] : memref<64x128xf32, #tpu.memory_space<vmem>>, vector<8x128xf32>
    %cst_26 = arith.constant dense<0.000000e+00> : vector<8x128xf32>
    %67 = tpu.matmul %62, %10, %cst_26 {dimension_numbers = #tpu.dot_dimension_numbers<[1], [0], [0], [1], [0, 0, 1, 1], [], []>} : vector<8x32xf32>, vector<32x128xf32>, vector<8x128xf32> -> vector<8x128xf32>
    %68 = arith.addf %66, %67 : vector<8x128xf32>
    %69 = arith.mulf %68, %19 : vector<8x128xf32>
    %70 = math.tanh %69 : vector<8x128xf32>
    %71 = arith.mulf %70, %19 : vector<8x128xf32>
    %72 = arith.addf %71, %22 : vector<8x128xf32>
    %73 = vector.extract_strided_slice %72 {offsets = [0, 0], sizes = [8, 32], strides = [1, 1]} : vector<8x128xf32> to vector<8x32xf32>
    %74 = vector.extract_strided_slice %72 {offsets = [0, 32], sizes = [8, 32], strides = [1, 1]} : vector<8x128xf32> to vector<8x32xf32>
    %75 = vector.extract_strided_slice %72 {offsets = [0, 64], sizes = [8, 32], strides = [1, 1]} : vector<8x128xf32> to vector<8x32xf32>
    %76 = vector.extract_strided_slice %72 {offsets = [0, 96], sizes = [8, 32], strides = [1, 1]} : vector<8x128xf32> to vector<8x32xf32>
    %77 = arith.mulf %74, %60 : vector<8x32xf32>
    %78 = arith.mulf %73, %75 : vector<8x32xf32>
    %79 = arith.addf %77, %78 : vector<8x32xf32>
    %80 = math.tanh %79 : vector<8x32xf32>
    %81 = arith.mulf %76, %80 : vector<8x32xf32>
    %c3_i32 = arith.constant 3 : i32
    %c8_i32_27 = arith.constant 8 : i32
    %82 = arith.muli %c3_i32, %c8_i32_27 : i32
    %83 = tpu.assume_multiple %82, 8 : i32
    %84 = arith.index_cast %83 : i32 to index
    %c0_28 = arith.constant 0 : index
    %85 = vector.load %arg6[%84, %c0_28] : memref<64x128xf32, #tpu.memory_space<vmem>>, vector<8x128xf32>
    %cst_29 = arith.constant dense<0.000000e+00> : vector<8x128xf32>
    %86 = tpu.matmul %81, %10, %cst_29 {dimension_numbers = #tpu.dot_dimension_numbers<[1], [0], [0], [1], [0, 0, 1, 1], [], []>} : vector<8x32xf32>, vector<32x128xf32>, vector<8x128xf32> -> vector<8x128xf32>
    %87 = arith.addf %85, %86 : vector<8x128xf32>
    %88 = arith.mulf %87, %19 : vector<8x128xf32>
    %89 = math.tanh %88 : vector<8x128xf32>
    %90 = arith.mulf %89, %19 : vector<8x128xf32>
    %91 = arith.addf %90, %22 : vector<8x128xf32>
    %92 = vector.extract_strided_slice %91 {offsets = [0, 0], sizes = [8, 32], strides = [1, 1]} : vector<8x128xf32> to vector<8x32xf32>
    %93 = vector.extract_strided_slice %91 {offsets = [0, 32], sizes = [8, 32], strides = [1, 1]} : vector<8x128xf32> to vector<8x32xf32>
    %94 = vector.extract_strided_slice %91 {offsets = [0, 64], sizes = [8, 32], strides = [1, 1]} : vector<8x128xf32> to vector<8x32xf32>
    %95 = vector.extract_strided_slice %91 {offsets = [0, 96], sizes = [8, 32], strides = [1, 1]} : vector<8x128xf32> to vector<8x32xf32>
    %96 = arith.mulf %93, %79 : vector<8x32xf32>
    %97 = arith.mulf %92, %94 : vector<8x32xf32>
    %98 = arith.addf %96, %97 : vector<8x32xf32>
    %99 = math.tanh %98 : vector<8x32xf32>
    %100 = arith.mulf %95, %99 : vector<8x32xf32>
    %c4_i32 = arith.constant 4 : i32
    %c8_i32_30 = arith.constant 8 : i32
    %101 = arith.muli %c4_i32, %c8_i32_30 : i32
    %102 = tpu.assume_multiple %101, 8 : i32
    %103 = arith.index_cast %102 : i32 to index
    %c0_31 = arith.constant 0 : index
    %104 = vector.load %arg6[%103, %c0_31] : memref<64x128xf32, #tpu.memory_space<vmem>>, vector<8x128xf32>
    %cst_32 = arith.constant dense<0.000000e+00> : vector<8x128xf32>
    %105 = tpu.matmul %100, %10, %cst_32 {dimension_numbers = #tpu.dot_dimension_numbers<[1], [0], [0], [1], [0, 0, 1, 1], [], []>} : vector<8x32xf32>, vector<32x128xf32>, vector<8x128xf32> -> vector<8x128xf32>
    %106 = arith.addf %104, %105 : vector<8x128xf32>
    %107 = arith.mulf %106, %19 : vector<8x128xf32>
    %108 = math.tanh %107 : vector<8x128xf32>
    %109 = arith.mulf %108, %19 : vector<8x128xf32>
    %110 = arith.addf %109, %22 : vector<8x128xf32>
    %111 = vector.extract_strided_slice %110 {offsets = [0, 0], sizes = [8, 32], strides = [1, 1]} : vector<8x128xf32> to vector<8x32xf32>
    %112 = vector.extract_strided_slice %110 {offsets = [0, 32], sizes = [8, 32], strides = [1, 1]} : vector<8x128xf32> to vector<8x32xf32>
    %113 = vector.extract_strided_slice %110 {offsets = [0, 64], sizes = [8, 32], strides = [1, 1]} : vector<8x128xf32> to vector<8x32xf32>
    %114 = vector.extract_strided_slice %110 {offsets = [0, 96], sizes = [8, 32], strides = [1, 1]} : vector<8x128xf32> to vector<8x32xf32>
    %115 = arith.mulf %112, %98 : vector<8x32xf32>
    %116 = arith.mulf %111, %113 : vector<8x32xf32>
    %117 = arith.addf %115, %116 : vector<8x32xf32>
    %118 = math.tanh %117 : vector<8x32xf32>
    %119 = arith.mulf %114, %118 : vector<8x32xf32>
    %c5_i32 = arith.constant 5 : i32
    %c8_i32_33 = arith.constant 8 : i32
    %120 = arith.muli %c5_i32, %c8_i32_33 : i32
    %121 = tpu.assume_multiple %120, 8 : i32
    %122 = arith.index_cast %121 : i32 to index
    %c0_34 = arith.constant 0 : index
    %123 = vector.load %arg6[%122, %c0_34] : memref<64x128xf32, #tpu.memory_space<vmem>>, vector<8x128xf32>
    %cst_35 = arith.constant dense<0.000000e+00> : vector<8x128xf32>
    %124 = tpu.matmul %119, %10, %cst_35 {dimension_numbers = #tpu.dot_dimension_numbers<[1], [0], [0], [1], [0, 0, 1, 1], [], []>} : vector<8x32xf32>, vector<32x128xf32>, vector<8x128xf32> -> vector<8x128xf32>
    %125 = arith.addf %123, %124 : vector<8x128xf32>
    %126 = arith.mulf %125, %19 : vector<8x128xf32>
    %127 = math.tanh %126 : vector<8x128xf32>
    %128 = arith.mulf %127, %19 : vector<8x128xf32>
    %129 = arith.addf %128, %22 : vector<8x128xf32>
    %130 = vector.extract_strided_slice %129 {offsets = [0, 0], sizes = [8, 32], strides = [1, 1]} : vector<8x128xf32> to vector<8x32xf32>
    %131 = vector.extract_strided_slice %129 {offsets = [0, 32], sizes = [8, 32], strides = [1, 1]} : vector<8x128xf32> to vector<8x32xf32>
    %132 = vector.extract_strided_slice %129 {offsets = [0, 64], sizes = [8, 32], strides = [1, 1]} : vector<8x128xf32> to vector<8x32xf32>
    %133 = vector.extract_strided_slice %129 {offsets = [0, 96], sizes = [8, 32], strides = [1, 1]} : vector<8x128xf32> to vector<8x32xf32>
    %134 = arith.mulf %131, %117 : vector<8x32xf32>
    %135 = arith.mulf %130, %132 : vector<8x32xf32>
    %136 = arith.addf %134, %135 : vector<8x32xf32>
    %137 = math.tanh %136 : vector<8x32xf32>
    %138 = arith.mulf %133, %137 : vector<8x32xf32>
    %c6_i32 = arith.constant 6 : i32
    %c8_i32_36 = arith.constant 8 : i32
    %139 = arith.muli %c6_i32, %c8_i32_36 : i32
    %140 = tpu.assume_multiple %139, 8 : i32
    %141 = arith.index_cast %140 : i32 to index
    %c0_37 = arith.constant 0 : index
    %142 = vector.load %arg6[%141, %c0_37] : memref<64x128xf32, #tpu.memory_space<vmem>>, vector<8x128xf32>
    %cst_38 = arith.constant dense<0.000000e+00> : vector<8x128xf32>
    %143 = tpu.matmul %138, %10, %cst_38 {dimension_numbers = #tpu.dot_dimension_numbers<[1], [0], [0], [1], [0, 0, 1, 1], [], []>} : vector<8x32xf32>, vector<32x128xf32>, vector<8x128xf32> -> vector<8x128xf32>
    %144 = arith.addf %142, %143 : vector<8x128xf32>
    %145 = arith.mulf %144, %19 : vector<8x128xf32>
    %146 = math.tanh %145 : vector<8x128xf32>
    %147 = arith.mulf %146, %19 : vector<8x128xf32>
    %148 = arith.addf %147, %22 : vector<8x128xf32>
    %149 = vector.extract_strided_slice %148 {offsets = [0, 0], sizes = [8, 32], strides = [1, 1]} : vector<8x128xf32> to vector<8x32xf32>
    %150 = vector.extract_strided_slice %148 {offsets = [0, 32], sizes = [8, 32], strides = [1, 1]} : vector<8x128xf32> to vector<8x32xf32>
    %151 = vector.extract_strided_slice %148 {offsets = [0, 64], sizes = [8, 32], strides = [1, 1]} : vector<8x128xf32> to vector<8x32xf32>
    %152 = vector.extract_strided_slice %148 {offsets = [0, 96], sizes = [8, 32], strides = [1, 1]} : vector<8x128xf32> to vector<8x32xf32>
    %153 = arith.mulf %150, %136 : vector<8x32xf32>
    %154 = arith.mulf %149, %151 : vector<8x32xf32>
    %155 = arith.addf %153, %154 : vector<8x32xf32>
    %156 = math.tanh %155 : vector<8x32xf32>
    %157 = arith.mulf %152, %156 : vector<8x32xf32>
    %c7_i32 = arith.constant 7 : i32
    %c8_i32_39 = arith.constant 8 : i32
    %158 = arith.muli %c7_i32, %c8_i32_39 : i32
    %159 = tpu.assume_multiple %158, 8 : i32
    %160 = arith.index_cast %159 : i32 to index
    %c0_40 = arith.constant 0 : index
    %161 = vector.load %arg6[%160, %c0_40] : memref<64x128xf32, #tpu.memory_space<vmem>>, vector<8x128xf32>
    %cst_41 = arith.constant dense<0.000000e+00> : vector<8x128xf32>
    %162 = tpu.matmul %157, %10, %cst_41 {dimension_numbers = #tpu.dot_dimension_numbers<[1], [0], [0], [1], [0, 0, 1, 1], [], []>} : vector<8x32xf32>, vector<32x128xf32>, vector<8x128xf32> -> vector<8x128xf32>
    %163 = arith.addf %161, %162 : vector<8x128xf32>
    %164 = arith.mulf %163, %19 : vector<8x128xf32>
    %165 = math.tanh %164 : vector<8x128xf32>
    %166 = arith.mulf %165, %19 : vector<8x128xf32>
    %167 = arith.addf %166, %22 : vector<8x128xf32>
    %168 = vector.extract_strided_slice %167 {offsets = [0, 0], sizes = [8, 32], strides = [1, 1]} : vector<8x128xf32> to vector<8x32xf32>
    %169 = vector.extract_strided_slice %167 {offsets = [0, 32], sizes = [8, 32], strides = [1, 1]} : vector<8x128xf32> to vector<8x32xf32>
    %170 = vector.extract_strided_slice %167 {offsets = [0, 64], sizes = [8, 32], strides = [1, 1]} : vector<8x128xf32> to vector<8x32xf32>
    %171 = vector.extract_strided_slice %167 {offsets = [0, 96], sizes = [8, 32], strides = [1, 1]} : vector<8x128xf32> to vector<8x32xf32>
    %172 = arith.mulf %169, %155 : vector<8x32xf32>
    %173 = arith.mulf %168, %170 : vector<8x32xf32>
    %174 = arith.addf %172, %173 : vector<8x32xf32>
    %175 = math.tanh %174 : vector<8x32xf32>
    %176 = arith.mulf %171, %175 : vector<8x32xf32>
    %c8_i32_42 = arith.constant 8 : i32
    %c0_43 = arith.constant 0 : index
    %c0_44 = arith.constant 0 : index
    %177 = vector.load %arg7[%c0_43, %c0_44] : memref<8x32xf32, #tpu.memory_space<vmem>>, vector<8x32xf32>
    tpu.vector_store %arg7[%c0_43, %c0_44], %176 {strides = array<i32>} : memref<8x32xf32, #tpu.memory_space<vmem>>, vector<8x32xf32>,
    %c0_45 = arith.constant 0 : index
    %c0_46 = arith.constant 0 : index
    %178 = vector.load %arg8[%c0_45, %c0_46] : memref<8x32xf32, #tpu.memory_space<vmem>>, vector<8x32xf32>
    tpu.vector_store %arg8[%c0_45, %c0_46], %174 {strides = array<i32>} : memref<8x32xf32, #tpu.memory_space<vmem>>, vector<8x32xf32>,
    %c0_47 = arith.constant 0 : index
    %c0_48 = arith.constant 0 : index
    %179 = vector.load %arg5[%c0_47, %c0_48] : memref<8x32xf32, #tpu.memory_space<vmem>>, vector<8x32xf32>
    tpu.vector_store %arg5[%c0_47, %c0_48], %176 {strides = array<i32>} : memref<8x32xf32, #tpu.memory_space<vmem>>, vector<8x32xf32>,
    return
  }
  func.func @transform_0(%arg0: i32) -> (i32, i32) {
    %c0_i32 = arith.constant 0 : i32
    %c0_i32_0 = arith.constant 0 : i32
    return %arg0, %c0_i32 : i32, i32
  }
  func.func @transform_1(%arg0: i32) -> (i32, i32) {
    %c0_i32 = arith.constant 0 : i32
    %c0_i32_0 = arith.constant 0 : i32
    %c0_i32_1 = arith.constant 0 : i32
    return %c0_i32, %c0_i32_0 : i32, i32
  }
  func.func @transform_2(%arg0: i32) -> (i32, i32) {
    %c0_i32 = arith.constant 0 : i32
    %c0_i32_0 = arith.constant 0 : i32
    %c0_i32_1 = arith.constant 0 : i32
    return %c0_i32, %c0_i32_0 : i32, i32
  }
  func.func @transform_3(%arg0: i32) -> (i32, i32) {
    %c0_i32 = arith.constant 0 : i32
    %c0_i32_0 = arith.constant 0 : i32
    %c0_i32_1 = arith.constant 0 : i32
    return %c0_i32, %c0_i32_0 : i32, i32
  }
  func.func @transform_4(%arg0: i32) -> (i32, i32) {
    %c0_i32 = arith.constant 0 : i32
    %c0_i32_0 = arith.constant 0 : i32
    %c0_i32_1 = arith.constant 0 : i32
    return %c0_i32, %c0_i32_0 : i32, i32
  }
}

</mosaic_0001>

<llo_original>
// kernel: tpu_custom_call.1
$region0: #{tpu_custom_call.1}
  #allocation0 [shape = 'u32[]', space=smem, size = 0x4, offset = 0x4, fixed_abs, tag = 'smem constant byte address 0x4 - core index']
  #allocation1 [shape = 'u32[144,128]{1,0:T(1,128)}', space=vmem, size = 0x12000, scoped, tag = 'internal scratch']
  #allocation2 [shape = 'f32[64,128]{1,0:T(8,128)}', space=vmem, size = 0x8000, scoped, tag = 'scratch operand']
  #allocation3 [shape = 'f32[8,32]{1,0:T(8,128)}', space=vmem, size = 0x1000, scoped, tag = 'scratch operand']
  #allocation4 [shape = 'f32[8,32]{1,0:T(8,128)}', space=vmem, size = 0x1000, scoped, tag = 'scratch operand']
  %s0 = inlined_call_operand.vmem [shape: f32[64,32], index: 0, kind: input, shape index: {}]
  %s1 = inlined_call_operand.vmem [shape: f32[32,128], index: 1, kind: input, shape index: {}]
  %s2 = inlined_call_operand.vmem [shape: f32[32,128], index: 2, kind: input, shape index: {}]
  %s3 = inlined_call_operand.vmem [shape: f32[1,128], index: 3, kind: input, shape index: {}]
  %s4 = inlined_call_operand.hbm [shape: f32[8,32], index: 4, kind: output, shape index: {}]
  %s5 = sld [smem:[#allocation0]]
  $region30: #{tpu_custom_call.1} parent=0
    _
  %s7 = ssub.s32 1, %s5
  %s8 = scalar_select 0, %s7, %s5
  $region1: #{tpu_custom_call.1} parent=0
    #allocation5 [shape = 'u8[4096]{0}', space=vmem, size = 0x1000, scoped, tag = 'output window, operand 0, single buffered']
    #allocation6 [shape = 's32[1]{0}', space=sflag, size = 0x4, scoped, tag = 'scoped memory for tpu_custom_call.1']
    %9 = vsyncpa [#allocation6], 0
    // Predicated region
    $region2: #{tpu_custom_call.1} parent=1 // pred_check
      _
    $region3: #{tpu_custom_call.1} parent=1 // pred_check_branch
      %11 = sbr.rel (0) target = $region5
    $region4: #{tpu_custom_call.1} parent=1 // pred_region
      _
    $region5: #{tpu_custom_call.1} parent=1 // pred_fallthru
      _
    // Predicated region
    $region6: #{tpu_custom_call.1} parent=1 // pred_check
      _
    $region7: #{tpu_custom_call.1} parent=1 // pred_check_branch
      %13 = sbr.rel (0) target = $region9
    $region8: #{tpu_custom_call.1} parent=1 // pred_region
      _
    $region9: #{tpu_custom_call.1} parent=1 // pred_fallthru
      _
    // Predicated region
    $region10: #{tpu_custom_call.1} parent=1 // pred_check
      _
    $region11: #{tpu_custom_call.1} parent=1 // pred_check_branch
      %15 = sbr.rel (0) target = $region13
    $region12: #{tpu_custom_call.1} parent=1 // pred_region
      _
    $region13: #{tpu_custom_call.1} parent=1 // pred_fallthru
      _
    // Predicated region
    $region14: #{tpu_custom_call.1} parent=1 // pred_check
      _
    $region15: #{tpu_custom_call.1} parent=1 // pred_check_branch
      %17 = sbr.rel (0) target = $region17
    $region16: #{tpu_custom_call.1} parent=1 // pred_region
      _
    $region17: #{tpu_custom_call.1} parent=1 // pred_fallthru
      _
    %p18 = scmp.eq.s32.totalorder 0, 0
    // Predicated region
    $region18: #{tpu_custom_call.1} parent=1 // pred_check
      %p19 = pneg %p18
    $region19: #{tpu_custom_call.1} parent=1 // pred_check_branch
      %21 = sbr.rel (%p19) target = $region21
    $region20: #{tpu_custom_call.1} parent=1 // pred_region
      %vm22 = vcmask 261120
      %23 = vst.msk [vmem:[#allocation3] sm:$0xff] %vm22, 0.0
      %24 = vst.msk [vmem:[#allocation4] sm:$0xff] %vm22, 0.0
    $region21: #{tpu_custom_call.1} parent=1 // pred_fallthru
      _
    %v25 = vld [vmem:[%s0] sm:$0xff]
    %v26 = vld [vmem:[%s0 + $0x8] sm:$0xff]
    %v27 = vld [vmem:[%s0 + $0x10] sm:$0xff]
    %v28 = vld [vmem:[%s0 + $0x18] sm:$0xff]
    %v29 = vld [vmem:[%s0 + $0x20] sm:$0xff]
    %v30 = vld [vmem:[%s0 + $0x28] sm:$0xff]
    %v31 = vld [vmem:[%s0 + $0x30] sm:$0xff]
    %v32 = vld [vmem:[%s0 + $0x38] sm:$0xff]
    %v33 = vld [vmem:[%s1] sm:$0xff]
    %v34 = vld [vmem:[%s1 + $0x8] sm:$0xff]
    %v35 = vld [vmem:[%s1 + $0x10] sm:$0xff]
    %v36 = vld [vmem:[%s1 + $0x18] sm:$0xff]
    %v37 = vld [vmem:[%s3] sm:$0x1]
    %v39 = vlaneseq
    %v40 = vshrl.u32 %v39, 7
    %v41 = vsub.s32 0, %v40
    %v42 = vrot.slane %v37, %v41
    %vm44 = vcmask 261120
    %v46 = vsel %vm44, %v25, 0
    %v49 = vsel %vm44, %v26, 0
    %v52 = vsel %vm44, %v27, 0
    %v55 = vsel %vm44, %v28, 0
    %v58 = vsel %vm44, %v29, 0
    %v61 = vsel %vm44, %v30, 0
    %v64 = vsel %vm44, %v31, 0
    %v67 = vsel %vm44, %v32, 0
    %69 = vmatprep.subr.mxu0 0.0
    %70 = vmatpush1.msra.mxu0 0.0
    %71 = vmatprep.subr.mxu0 0.0
    %72 = vmatpush1.msra.mxu0 0.0
    %73 = vmatprep.subr.mxu0 0.0
    %74 = vmatpush1.msra.mxu0 0.0
    %75 = vmatprep.subr.mxu0 0.0
    %76 = vmatpush1.msra.mxu0 0.0
    %77 = vmatprep.subr.mxu0 0.0
    %78 = vmatpush1.msra.mxu0 0.0
    %79 = vmatprep.subr.mxu0 0.0
    %80 = vmatpush1.msra.mxu0 0.0
    %81 = vmatprep.subr.mxu0 0.0
    %82 = vmatpush1.msra.mxu0 0.0
    %83 = vmatprep.subr.mxu0 0.0
    %84 = vmatpush1.msra.mxu0 0.0
    %85 = vmatprep.subr.mxu0 0.0
    %86 = vmatpush1.msra.mxu0 0.0
    %87 = vmatprep.subr.mxu0 0.0
    %88 = vmatpush1.msra.mxu0 0.0
    %89 = vmatprep.subr.mxu0 0.0
    %90 = vmatpush1.msra.mxu0 0.0
    %91 = vmatprep.subr.mxu0 0.0
    %92 = vmatpush1.msra.mxu0 0.0
    %93 = vmatprep.subr.mxu0 0.0
    %94 = vmatpush1.msra.mxu0 %v36
    %95 = vmatprep.subr.mxu0 0.0
    %96 = vmatpush1.msra.mxu0 %v35
    %97 = vmatprep.subr.mxu0 0.0
    %98 = vmatpush1.msra.mxu0 %v34
    %99 = vmatprep.subr.mxu0 0.0
    %100 = vmatpush1.msra.mxu0 %v33
    %101 = vmatprep.subr.mxu0 0.0
    %102 = vmatpush2.msra.mxu0 0.0
    %103 = vmatprep.subr.mxu0 0.0
    %104 = vmatpush2.msra.mxu0 0.0
    %105 = vmatprep.subr.mxu0 0.0
    %106 = vmatpush2.msra.mxu0 0.0
    %107 = vmatprep.subr.mxu0 0.0
    %108 = vmatpush2.msra.mxu0 0.0
    %109 = vmatprep.subr.mxu0 0.0
    %110 = vmatpush2.msra.mxu0 0.0
    %111 = vmatprep.subr.mxu0 0.0
    %112 = vmatpush2.msra.mxu0 0.0
    %113 = vmatprep.subr.mxu0 0.0
    %114 = vmatpush2.msra.mxu0 0.0
    %115 = vmatprep.subr.mxu0 0.0
    %116 = vmatpush2.msra.mxu0 0.0
    %117 = vmatprep.subr.mxu0 0.0
    %118 = vmatpush2.msra.mxu0 0.0
    %119 = vmatprep.subr.mxu0 0.0
    %120 = vmatpush2.msra.mxu0 0.0
    %121 = vmatprep.subr.mxu0 0.0
    %122 = vmatpush2.msra.mxu0 0.0
    %123 = vmatprep.subr.mxu0 0.0
    %124 = vmatpush2.msra.mxu0 0.0
    %125 = vmatprep.subr.mxu0 0.0
    %126 = vmatpush2.msra.mxu0 0.0
    %127 = vmatprep.subr.mxu0 0.0
    %128 = vmatpush2.msra.mxu0 0.0
    %129 = vmatprep.subr.mxu0 0.0
    %130 = vmatpush2.msra.mxu0 0.0
    %131 = vmatprep.subr.mxu0 0.0
    %132 = vmatpush2.msra.mxu0 0.0
    %133 = vmatprep.mubr.f32.mxu0 0.0
    %134 = vmatmul.mubr.f32.gmra.mxu0 %v46
    %v135 = vpop.f32.mrf.mxu0
    %v136 = vadd.f32 %v42, %v135
    %v137 = vpop.f32.mrf.mxu0
    %138 = vmatprep.mubr.f32.mxu0 0.0
    %139 = vmatmul.mubr.f32.gmra.mxu0 %v49
    %v140 = vpop.f32.mrf.mxu0
    %v141 = vadd.f32 %v42, %v140
    %v142 = vpop.f32.mrf.mxu0
    %143 = vmatprep.mubr.f32.mxu0 0.0
    %144 = vmatmul.mubr.f32.gmra.mxu0 %v52
    %v145 = vpop.f32.mrf.mxu0
    %v146 = vadd.f32 %v42, %v145
    %v147 = vpop.f32.mrf.mxu0
    %148 = vmatprep.mubr.f32.mxu0 0.0
    %149 = vmatmul.mubr.f32.gmra.mxu0 %v55
    %v150 = vpop.f32.mrf.mxu0
    %v151 = vadd.f32 %v42, %v150
    %v152 = vpop.f32.mrf.mxu0
    %153 = vmatprep.mubr.f32.mxu0 0.0
    %154 = vmatmul.mubr.f32.gmra.mxu0 %v58
    %v155 = vpop.f32.mrf.mxu0
    %v156 = vadd.f32 %v42, %v155
    %v157 = vpop.f32.mrf.mxu0
    %158 = vmatprep.mubr.f32.mxu0 0.0
    %159 = vmatmul.mubr.f32.gmra.mxu0 %v61
    %v160 = vpop.f32.mrf.mxu0
    %v161 = vadd.f32 %v42, %v160
    %v162 = vpop.f32.mrf.mxu0
    %163 = vmatprep.mubr.f32.mxu0 0.0
    %164 = vmatmul.mubr.f32.gmra.mxu0 %v64
    %v165 = vpop.f32.mrf.mxu0
    %v166 = vadd.f32 %v42, %v165
    %v167 = vpop.f32.mrf.mxu0
    %168 = vmatprep.mubr.f32.mxu0 0.0
    %169 = vmatmul.mubr.f32.gmra.mxu0 %v67
    %v170 = vpop.f32.mrf.mxu0
    %v171 = vadd.f32 %v42, %v170
    %v172 = vpop.f32.mrf.mxu0
    %173 = vdwg.mxu0
    %174 = vst [vmem:[#allocation2] sm:$0xff] %v136
    %175 = vst [vmem:[#allocation2 + $0x8] sm:$0xff] %v141
    %176 = vst [vmem:[#allocation2 + $0x10] sm:$0xff] %v146
    %177 = vst [vmem:[#allocation2 + $0x18] sm:$0xff] %v151
    %178 = vst [vmem:[#allocation2 + $0x20] sm:$0xff] %v156
    %179 = vst [vmem:[#allocation2 + $0x28] sm:$0xff] %v161
    %180 = vst [vmem:[#allocation2 + $0x30] sm:$0xff] %v166
    %181 = vst [vmem:[#allocation2 + $0x38] sm:$0xff] %v171
    %v182 = vld [vmem:[%s2] sm:$0xff]
    %v183 = vld [vmem:[%s2 + $0x8] sm:$0xff]
    %v184 = vld [vmem:[%s2 + $0x10] sm:$0xff]
    %v185 = vld [vmem:[%s2 + $0x18] sm:$0xff]
    %v186 = vlaneseq
    %v187 = vand.u32 %v186, 127
    %vm188 = vcmp.ge.s32.totalorder %v187, 64
    %vm189 = vcmp.lt.s32.totalorder %v187, 96
    %vm190 = vmand %vm188, %vm189
    %v191 = vsel %vm190, 1.0, 0.5
    %v192 = vsel %vm190, 0.0, 0.5
    %v193 = vld [vmem:[#allocation3] sm:$0xff]
    %v194 = vld [vmem:[#allocation4] sm:$0xff]
    %v195 = vld [vmem:[#allocation2] sm:$0xff]
    %v197 = vsel %vm44, %v193, 0
    %199 = vmatprep.subr.mxu0 0.0
    %200 = vmatpush1.msra.mxu0 0.0
    %201 = vmatprep.subr.mxu0 0.0
    %202 = vmatpush1.msra.mxu0 0.0
    %203 = vmatprep.subr.mxu0 0.0
    %204 = vmatpush1.msra.mxu0 0.0
    %205 = vmatprep.subr.mxu0 0.0
    %206 = vmatpush1.msra.mxu0 0.0
    %207 = vmatprep.subr.mxu0 0.0
    %208 = vmatpush1.msra.mxu0 0.0
    %209 = vmatprep.subr.mxu0 0.0
    %210 = vmatpush1.msra.mxu0 0.0
    %211 = vmatprep.subr.mxu0 0.0
    %212 = vmatpush1.msra.mxu0 0.0
    %213 = vmatprep.subr.mxu0 0.0
    %214 = vmatpush1.msra.mxu0 0.0
    %215 = vmatprep.subr.mxu0 0.0
    %216 = vmatpush1.msra.mxu0 0.0
    %217 = vmatprep.subr.mxu0 0.0
    %218 = vmatpush1.msra.mxu0 0.0
    %219 = vmatprep.subr.mxu0 0.0
    %220 = vmatpush1.msra.mxu0 0.0
    %221 = vmatprep.subr.mxu0 0.0
    %222 = vmatpush1.msra.mxu0 0.0
    %223 = vmatprep.subr.mxu0 0.0
    %224 = vmatpush1.msra.mxu0 %v185
    %225 = vmatprep.subr.mxu0 0.0
    %226 = vmatpush1.msra.mxu0 %v184
    %227 = vmatprep.subr.mxu0 0.0
    %228 = vmatpush1.msra.mxu0 %v183
    %229 = vmatprep.subr.mxu0 0.0
    %230 = vmatpush1.msra.mxu0 %v182
    %231 = vmatprep.subr.mxu0 0.0
    %232 = vmatpush2.msra.mxu0 0.0
    %233 = vmatprep.subr.mxu0 0.0
    %234 = vmatpush2.msra.mxu0 0.0
    %235 = vmatprep.subr.mxu0 0.0
    %236 = vmatpush2.msra.mxu0 0.0
    %237 = vmatprep.subr.mxu0 0.0
    %238 = vmatpush2.msra.mxu0 0.0
    %239 = vmatprep.subr.mxu0 0.0
    %240 = vmatpush2.msra.mxu0 0.0
    %241 = vmatprep.subr.mxu0 0.0
    %242 = vmatpush2.msra.mxu0 0.0
    %243 = vmatprep.subr.mxu0 0.0
    %244 = vmatpush2.msra.mxu0 0.0
    %245 = vmatprep.subr.mxu0 0.0
    %246 = vmatpush2.msra.mxu0 0.0
    %247 = vmatprep.subr.mxu0 0.0
    %248 = vmatpush2.msra.mxu0 0.0
    %249 = vmatprep.subr.mxu0 0.0
    %250 = vmatpush2.msra.mxu0 0.0
    %251 = vmatprep.subr.mxu0 0.0
    %252 = vmatpush2.msra.mxu0 0.0
    %253 = vmatprep.subr.mxu0 0.0
    %254 = vmatpush2.msra.mxu0 0.0
    %255 = vmatprep.subr.mxu0 0.0
    %256 = vmatpush2.msra.mxu0 0.0
    %257 = vmatprep.subr.mxu0 0.0
    %258 = vmatpush2.msra.mxu0 0.0
    %259 = vmatprep.subr.mxu0 0.0
    %260 = vmatpush2.msra.mxu0 0.0
    %261 = vmatprep.subr.mxu0 0.0
    %262 = vmatpush2.msra.mxu0 0.0
    %263 = vmatprep.mubr.f32.mxu0 0.0
    %264 = vmatmul.mubr.f32.gmra.mxu0 %v197
    %v265 = vpop.f32.mrf.mxu0
    %v266 = vadd.f32 0.0, %v265
    %v267 = vpop.f32.mrf.mxu0
    %268 = vdwg.mxu0
    %v269 = vadd.f32 %v195, %v266
    %v270 = vmul.f32 %v269, %v191
    %v271 = vtanh.pop %v270
    %v272 = vmul.f32 %v271, %v191
    %v273 = vadd.f32 %v272, %v192
    %275 = vrot.lane.b32.xlu0 %v194, 32
    %v276 = vpop.permute.xlu0 %275
    %v278 = vmul.f32 %v273, %v276
    %280 = vrot.lane.b32.xlu0 %v273, 64
    %v281 = vpop.permute.xlu0 %280
    %v283 = vmul.f32 %v273, %v281
    %285 = vrot.lane.b32.xlu0 %v283, 32
    %v286 = vpop.permute.xlu0 %285
    %v288 = vadd.f32 %v278, %v286
    %v289 = vtanh.pop %v288
    %291 = vrot.lane.b32.xlu0 %v289, 64
    %v292 = vpop.permute.xlu0 %291
    %v294 = vmul.f32 %v273, %v292
    %s295 = scalar_lea.vmem [#allocation2], 8
    %v296 = vld [vmem:[%s295] sm:$0xff]
    %298 = vrot.lane.b32.xlu0 %v294, 32
    %v299 = vpop.permute.xlu0 %298
    %v300 = vsel %vm44, %v299, 0
    %302 = vmatprep.subr.mxu0 0.0
    %303 = vmatpush1.msra.mxu0 0.0
    %304 = vmatprep.subr.mxu0 0.0
    %305 = vmatpush1.msra.mxu0 0.0
    %306 = vmatprep.subr.mxu0 0.0
    %307 = vmatpush1.msra.mxu0 0.0
    %308 = vmatprep.subr.mxu0 0.0
    %309 = vmatpush1.msra.mxu0 0.0
    %310 = vmatprep.subr.mxu0 0.0
    %311 = vmatpush1.msra.mxu0 0.0
    %312 = vmatprep.subr.mxu0 0.0
    %313 = vmatpush1.msra.mxu0 0.0
    %314 = vmatprep.subr.mxu0 0.0
    %315 = vmatpush1.msra.mxu0 0.0
    %316 = vmatprep.subr.mxu0 0.0
    %317 = vmatpush1.msra.mxu0 0.0
    %318 = vmatprep.subr.mxu0 0.0
    %319 = vmatpush1.msra.mxu0 0.0
    %320 = vmatprep.subr.mxu0 0.0
    %321 = vmatpush1.msra.mxu0 0.0
    %322 = vmatprep.subr.mxu0 0.0
    %323 = vmatpush1.msra.mxu0 0.0
    %324 = vmatprep.subr.mxu0 0.0
    %325 = vmatpush1.msra.mxu0 0.0
    %326 = vmatprep.subr.mxu0 0.0
    %327 = vmatpush1.msra.mxu0 %v185
    %328 = vmatprep.subr.mxu0 0.0
    %329 = vmatpush1.msra.mxu0 %v184
    %330 = vmatprep.subr.mxu0 0.0
    %331 = vmatpush1.msra.mxu0 %v183
    %332 = vmatprep.subr.mxu0 0.0
    %333 = vmatpush1.msra.mxu0 %v182
    %334 = vmatprep.subr.mxu0 0.0
    %335 = vmatpush2.msra.mxu0 0.0
    %336 = vmatprep.subr.mxu0 0.0
    %337 = vmatpush2.msra.mxu0 0.0
    %338 = vmatprep.subr.mxu0 0.0
    %339 = vmatpush2.msra.mxu0 0.0
    %340 = vmatprep.subr.mxu0 0.0
    %341 = vmatpush2.msra.mxu0 0.0
    %342 = vmatprep.subr.mxu0 0.0
    %343 = vmatpush2.msra.mxu0 0.0
    %344 = vmatprep.subr.mxu0 0.0
    %345 = vmatpush2.msra.mxu0 0.0
    %346 = vmatprep.subr.mxu0 0.0
    %347 = vmatpush2.msra.mxu0 0.0
    %348 = vmatprep.subr.mxu0 0.0
    %349 = vmatpush2.msra.mxu0 0.0
    %350 = vmatprep.subr.mxu0 0.0
    %351 = vmatpush2.msra.mxu0 0.0
    %352 = vmatprep.subr.mxu0 0.0
    %353 = vmatpush2.msra.mxu0 0.0
    %354 = vmatprep.subr.mxu0 0.0
    %355 = vmatpush2.msra.mxu0 0.0
    %356 = vmatprep.subr.mxu0 0.0
    %357 = vmatpush2.msra.mxu0 0.0
    %358 = vmatprep.subr.mxu0 0.0
    %359 = vmatpush2.msra.mxu0 0.0
    %360 = vmatprep.subr.mxu0 0.0
    %361 = vmatpush2.msra.mxu0 0.0
    %362 = vmatprep.subr.mxu0 0.0
    %363 = vmatpush2.msra.mxu0 0.0
    %364 = vmatprep.subr.mxu0 0.0
    %365 = vmatpush2.msra.mxu0 0.0
    %366 = vmatprep.mubr.f32.mxu0 0.0
    %367 = vmatmul.mubr.f32.gmra.mxu0 %v300
    %v368 = vpop.f32.mrf.mxu0
    %v369 = vadd.f32 0.0, %v368
    %v370 = vpop.f32.mrf.mxu0
    %371 = vdwg.mxu0
    %v372 = vadd.f32 %v296, %v369
    %v373 = vmul.f32 %v372, %v191
    %v374 = vtanh.pop %v373
    %v375 = vmul.f32 %v374, %v191
    %v376 = vadd.f32 %v375, %v192
    %v377 = vmul.f32 %v376, %v288
    %379 = vrot.lane.b32.xlu0 %v376, 64
    %v380 = vpop.permute.xlu0 %379
    %v382 = vmul.f32 %v376, %v380
    %384 = vrot.lane.b32.xlu0 %v382, 32
    %v385 = vpop.permute.xlu0 %384
    %v387 = vadd.f32 %v377, %v385
    %v388 = vtanh.pop %v387
    %390 = vrot.lane.b32.xlu0 %v388, 64
    %v391 = vpop.permute.xlu0 %390
    %v393 = vmul.f32 %v376, %v391
    %s394 = scalar_lea.vmem [#allocation2], 16
    %v395 = vld [vmem:[%s394] sm:$0xff]
    %397 = vrot.lane.b32.xlu0 %v393, 32
    %v398 = vpop.permute.xlu0 %397
    %v399 = vsel %vm44, %v398, 0
    %401 = vmatprep.subr.mxu0 0.0
    %402 = vmatpush1.msra.mxu0 0.0
    %403 = vmatprep.subr.mxu0 0.0
    %404 = vmatpush1.msra.mxu0 0.0
    %405 = vmatprep.subr.mxu0 0.0
    %406 = vmatpush1.msra.mxu0 0.0
    %407 = vmatprep.subr.mxu0 0.0
    %408 = vmatpush1.msra.mxu0 0.0
    %409 = vmatprep.subr.mxu0 0.0
    %410 = vmatpush1.msra.mxu0 0.0
    %411 = vmatprep.subr.mxu0 0.0
    %412 = vmatpush1.msra.mxu0 0.0
    %413 = vmatprep.subr.mxu0 0.0
    %414 = vmatpush1.msra.mxu0 0.0
    %415 = vmatprep.subr.mxu0 0.0
    %416 = vmatpush1.msra.mxu0 0.0
    %417 = vmatprep.subr.mxu0 0.0
    %418 = vmatpush1.msra.mxu0 0.0
    %419 = vmatprep.subr.mxu0 0.0
    %420 = vmatpush1.msra.mxu0 0.0
    %421 = vmatprep.subr.mxu0 0.0
    %422 = vmatpush1.msra.mxu0 0.0
    %423 = vmatprep.subr.mxu0 0.0
    %424 = vmatpush1.msra.mxu0 0.0
    %425 = vmatprep.subr.mxu0 0.0
    %426 = vmatpush1.msra.mxu0 %v185
    %427 = vmatprep.subr.mxu0 0.0
    %428 = vmatpush1.msra.mxu0 %v184
    %429 = vmatprep.subr.mxu0 0.0
    %430 = vmatpush1.msra.mxu0 %v183
    %431 = vmatprep.subr.mxu0 0.0
    %432 = vmatpush1.msra.mxu0 %v182
    %433 = vmatprep.subr.mxu0 0.0
    %434 = vmatpush2.msra.mxu0 0.0
    %435 = vmatprep.subr.mxu0 0.0
    %436 = vmatpush2.msra.mxu0 0.0
    %437 = vmatprep.subr.mxu0 0.0
    %438 = vmatpush2.msra.mxu0 0.0
    %439 = vmatprep.subr.mxu0 0.0
    %440 = vmatpush2.msra.mxu0 0.0
    %441 = vmatprep.subr.mxu0 0.0
    %442 = vmatpush2.msra.mxu0 0.0
    %443 = vmatprep.subr.mxu0 0.0
    %444 = vmatpush2.msra.mxu0 0.0
    %445 = vmatprep.subr.mxu0 0.0
    %446 = vmatpush2.msra.mxu0 0.0
    %447 = vmatprep.subr.mxu0 0.0
    %448 = vmatpush2.msra.mxu0 0.0
    %449 = vmatprep.subr.mxu0 0.0
    %450 = vmatpush2.msra.mxu0 0.0
    %451 = vmatprep.subr.mxu0 0.0
    %452 = vmatpush2.msra.mxu0 0.0
    %453 = vmatprep.subr.mxu0 0.0
    %454 = vmatpush2.msra.mxu0 0.0
    %455 = vmatprep.subr.mxu0 0.0
    %456 = vmatpush2.msra.mxu0 0.0
    %457 = vmatprep.subr.mxu0 0.0
    %458 = vmatpush2.msra.mxu0 0.0
    %459 = vmatprep.subr.mxu0 0.0
    %460 = vmatpush2.msra.mxu0 0.0
    %461 = vmatprep.subr.mxu0 0.0
    %462 = vmatpush2.msra.mxu0 0.0
    %463 = vmatprep.subr.mxu0 0.0
    %464 = vmatpush2.msra.mxu0 0.0
    %465 = vmatprep.mubr.f32.mxu0 0.0
    %466 = vmatmul.mubr.f32.gmra.mxu0 %v399
    %v467 = vpop.f32.mrf.mxu0
    %v468 = vadd.f32 0.0, %v467
    %v469 = vpop.f32.mrf.mxu0
    %470 = vdwg.mxu0
    %v471 = vadd.f32 %v395, %v468
    %v472 = vmul.f32 %v471, %v191
    %v473 = vtanh.pop %v472
    %v474 = vmul.f32 %v473, %v191
    %v475 = vadd.f32 %v474, %v192
    %v476 = vmul.f32 %v475, %v387
    %478 = vrot.lane.b32.xlu0 %v475, 64
    %v479 = vpop.permute.xlu0 %478
    %v481 = vmul.f32 %v475, %v479
    %483 = vrot.lane.b32.xlu0 %v481, 32
    %v484 = vpop.permute.xlu0 %483
    %v486 = vadd.f32 %v476, %v484
    %v487 = vtanh.pop %v486
    %489 = vrot.lane.b32.xlu0 %v487, 64
    %v490 = vpop.permute.xlu0 %489
    %v492 = vmul.f32 %v475, %v490
    %s493 = scalar_lea.vmem [#allocation2], 24
    %v494 = vld [vmem:[%s493] sm:$0xff]
    %496 = vrot.lane.b32.xlu0 %v492, 32
    %v497 = vpop.permute.xlu0 %496
    %v498 = vsel %vm44, %v497, 0
    %500 = vmatprep.subr.mxu0 0.0
    %501 = vmatpush1.msra.mxu0 0.0
    %502 = vmatprep.subr.mxu0 0.0
    %503 = vmatpush1.msra.mxu0 0.0
    %504 = vmatprep.subr.mxu0 0.0
    %505 = vmatpush1.msra.mxu0 0.0
    %506 = vmatprep.subr.mxu0 0.0
    %507 = vmatpush1.msra.mxu0 0.0
    %508 = vmatprep.subr.mxu0 0.0
    %509 = vmatpush1.msra.mxu0 0.0
    %510 = vmatprep.subr.mxu0 0.0
    %511 = vmatpush1.msra.mxu0 0.0
    %512 = vmatprep.subr.mxu0 0.0
    %513 = vmatpush1.msra.mxu0 0.0
    %514 = vmatprep.subr.mxu0 0.0
    %515 = vmatpush1.msra.mxu0 0.0
    %516 = vmatprep.subr.mxu0 0.0
    %517 = vmatpush1.msra.mxu0 0.0
    %518 = vmatprep.subr.mxu0 0.0
    %519 = vmatpush1.msra.mxu0 0.0
    %520 = vmatprep.subr.mxu0 0.0
    %521 = vmatpush1.msra.mxu0 0.0
    %522 = vmatprep.subr.mxu0 0.0
    %523 = vmatpush1.msra.mxu0 0.0
    %524 = vmatprep.subr.mxu0 0.0
    %525 = vmatpush1.msra.mxu0 %v185
    %526 = vmatprep.subr.mxu0 0.0
    %527 = vmatpush1.msra.mxu0 %v184
    %528 = vmatprep.subr.mxu0 0.0
    %529 = vmatpush1.msra.mxu0 %v183
    %530 = vmatprep.subr.mxu0 0.0
    %531 = vmatpush1.msra.mxu0 %v182
    %532 = vmatprep.subr.mxu0 0.0
    %533 = vmatpush2.msra.mxu0 0.0
    %534 = vmatprep.subr.mxu0 0.0
    %535 = vmatpush2.msra.mxu0 0.0
    %536 = vmatprep.subr.mxu0 0.0
    %537 = vmatpush2.msra.mxu0 0.0
    %538 = vmatprep.subr.mxu0 0.0
    %539 = vmatpush2.msra.mxu0 0.0
    %540 = vmatprep.subr.mxu0 0.0
    %541 = vmatpush2.msra.mxu0 0.0
    %542 = vmatprep.subr.mxu0 0.0
    %543 = vmatpush2.msra.mxu0 0.0
    %544 = vmatprep.subr.mxu0 0.0
    %545 = vmatpush2.msra.mxu0 0.0
    %546 = vmatprep.subr.mxu0 0.0
    %547 = vmatpush2.msra.mxu0 0.0
    %548 = vmatprep.subr.mxu0 0.0
    %549 = vmatpush2.msra.mxu0 0.0
    %550 = vmatprep.subr.mxu0 0.0
    %551 = vmatpush2.msra.mxu0 0.0
    %552 = vmatprep.subr.mxu0 0.0
    %553 = vmatpush2.msra.mxu0 0.0
    %554 = vmatprep.subr.mxu0 0.0
    %555 = vmatpush2.msra.mxu0 0.0
    %556 = vmatprep.subr.mxu0 0.0
    %557 = vmatpush2.msra.mxu0 0.0
    %558 = vmatprep.subr.mxu0 0.0
    %559 = vmatpush2.msra.mxu0 0.0
    %560 = vmatprep.subr.mxu0 0.0
    %561 = vmatpush2.msra.mxu0 0.0
    %562 = vmatprep.subr.mxu0 0.0
    %563 = vmatpush2.msra.mxu0 0.0
    %564 = vmatprep.mubr.f32.mxu0 0.0
    %565 = vmatmul.mubr.f32.gmra.mxu0 %v498
    %v566 = vpop.f32.mrf.mxu0
    %v567 = vadd.f32 0.0, %v566
    %v568 = vpop.f32.mrf.mxu0
    %569 = vdwg.mxu0
    %v570 = vadd.f32 %v494, %v567
    %v571 = vmul.f32 %v570, %v191
    %v572 = vtanh.pop %v571
    %v573 = vmul.f32 %v572, %v191
    %v574 = vadd.f32 %v573, %v192
    %v575 = vmul.f32 %v574, %v486
    %577 = vrot.lane.b32.xlu0 %v574, 64
    %v578 = vpop.permute.xlu0 %577
    %v580 = vmul.f32 %v574, %v578
    %582 = vrot.lane.b32.xlu0 %v580, 32
    %v583 = vpop.permute.xlu0 %582
    %v585 = vadd.f32 %v575, %v583
    %v586 = vtanh.pop %v585
    %588 = vrot.lane.b32.xlu0 %v586, 64
    %v589 = vpop.permute.xlu0 %588
    %v591 = vmul.f32 %v574, %v589
    %s592 = scalar_lea.vmem [#allocation2], 32
    %v593 = vld [vmem:[%s592] sm:$0xff]
    %595 = vrot.lane.b32.xlu0 %v591, 32
    %v596 = vpop.permute.xlu0 %595
    %v597 = vsel %vm44, %v596, 0
    %599 = vmatprep.subr.mxu0 0.0
    %600 = vmatpush1.msra.mxu0 0.0
    %601 = vmatprep.subr.mxu0 0.0
    %602 = vmatpush1.msra.mxu0 0.0
    %603 = vmatprep.subr.mxu0 0.0
    %604 = vmatpush1.msra.mxu0 0.0
    %605 = vmatprep.subr.mxu0 0.0
    %606 = vmatpush1.msra.mxu0 0.0
    %607 = vmatprep.subr.mxu0 0.0
    %608 = vmatpush1.msra.mxu0 0.0
    %609 = vmatprep.subr.mxu0 0.0
    %610 = vmatpush1.msra.mxu0 0.0
    %611 = vmatprep.subr.mxu0 0.0
    %612 = vmatpush1.msra.mxu0 0.0
    %613 = vmatprep.subr.mxu0 0.0
    %614 = vmatpush1.msra.mxu0 0.0
    %615 = vmatprep.subr.mxu0 0.0
    %616 = vmatpush1.msra.mxu0 0.0
    %617 = vmatprep.subr.mxu0 0.0
    %618 = vmatpush1.msra.mxu0 0.0
    %619 = vmatprep.subr.mxu0 0.0
    %620 = vmatpush1.msra.mxu0 0.0
    %621 = vmatprep.subr.mxu0 0.0
    %622 = vmatpush1.msra.mxu0 0.0
    %623 = vmatprep.subr.mxu0 0.0
    %624 = vmatpush1.msra.mxu0 %v185
    %625 = vmatprep.subr.mxu0 0.0
    %626 = vmatpush1.msra.mxu0 %v184
    %627 = vmatprep.subr.mxu0 0.0
    %628 = vmatpush1.msra.mxu0 %v183
    %629 = vmatprep.subr.mxu0 0.0
    %630 = vmatpush1.msra.mxu0 %v182
    %631 = vmatprep.subr.mxu0 0.0
    %632 = vmatpush2.msra.mxu0 0.0
    %633 = vmatprep.subr.mxu0 0.0
    %634 = vmatpush2.msra.mxu0 0.0
    %635 = vmatprep.subr.mxu0 0.0
    %636 = vmatpush2.msra.mxu0 0.0
    %637 = vmatprep.subr.mxu0 0.0
    %638 = vmatpush2.msra.mxu0 0.0
    %639 = vmatprep.subr.mxu0 0.0
    %640 = vmatpush2.msra.mxu0 0.0
    %641 = vmatprep.subr.mxu0 0.0
    %642 = vmatpush2.msra.mxu0 0.0
    %643 = vmatprep.subr.mxu0 0.0
    %644 = vmatpush2.msra.mxu0 0.0
    %645 = vmatprep.subr.mxu0 0.0
    %646 = vmatpush2.msra.mxu0 0.0
    %647 = vmatprep.subr.mxu0 0.0
    %648 = vmatpush2.msra.mxu0 0.0
    %649 = vmatprep.subr.mxu0 0.0
    %650 = vmatpush2.msra.mxu0 0.0
    %651 = vmatprep.subr.mxu0 0.0
    %652 = vmatpush2.msra.mxu0 0.0
    %653 = vmatprep.subr.mxu0 0.0
    %654 = vmatpush2.msra.mxu0 0.0
    %655 = vmatprep.subr.mxu0 0.0
    %656 = vmatpush2.msra.mxu0 0.0
    %657 = vmatprep.subr.mxu0 0.0
    %658 = vmatpush2.msra.mxu0 0.0
    %659 = vmatprep.subr.mxu0 0.0
    %660 = vmatpush2.msra.mxu0 0.0
    %661 = vmatprep.subr.mxu0 0.0
    %662 = vmatpush2.msra.mxu0 0.0
    %663 = vmatprep.mubr.f32.mxu0 0.0
    %664 = vmatmul.mubr.f32.gmra.mxu0 %v597
    %v665 = vpop.f32.mrf.mxu0
    %v666 = vadd.f32 0.0, %v665
    %v667 = vpop.f32.mrf.mxu0
    %668 = vdwg.mxu0
    %v669 = vadd.f32 %v593, %v666
    %v670 = vmul.f32 %v669, %v191
    %v671 = vtanh.pop %v670
    %v672 = vmul.f32 %v671, %v191
    %v673 = vadd.f32 %v672, %v192
    %v674 = vmul.f32 %v673, %v585
    %676 = vrot.lane.b32.xlu0 %v673, 64
    %v677 = vpop.permute.xlu0 %676
    %v679 = vmul.f32 %v673, %v677
    %681 = vrot.lane.b32.xlu0 %v679, 32
    %v682 = vpop.permute.xlu0 %681
    %v684 = vadd.f32 %v674, %v682
    %v685 = vtanh.pop %v684
    %687 = vrot.lane.b32.xlu0 %v685, 64
    %v688 = vpop.permute.xlu0 %687
    %v690 = vmul.f32 %v673, %v688
    %s691 = scalar_lea.vmem [#allocation2], 40
    %v692 = vld [vmem:[%s691] sm:$0xff]
    %694 = vrot.lane.b32.xlu0 %v690, 32
    %v695 = vpop.permute.xlu0 %694
    %v696 = vsel %vm44, %v695, 0
    %698 = vmatprep.subr.mxu0 0.0
    %699 = vmatpush1.msra.mxu0 0.0
    %700 = vmatprep.subr.mxu0 0.0
    %701 = vmatpush1.msra.mxu0 0.0
    %702 = vmatprep.subr.mxu0 0.0
    %703 = vmatpush1.msra.mxu0 0.0
    %704 = vmatprep.subr.mxu0 0.0
    %705 = vmatpush1.msra.mxu0 0.0
    %706 = vmatprep.subr.mxu0 0.0
    %707 = vmatpush1.msra.mxu0 0.0
    %708 = vmatprep.subr.mxu0 0.0
    %709 = vmatpush1.msra.mxu0 0.0
    %710 = vmatprep.subr.mxu0 0.0
    %711 = vmatpush1.msra.mxu0 0.0
    %712 = vmatprep.subr.mxu0 0.0
    %713 = vmatpush1.msra.mxu0 0.0
    %714 = vmatprep.subr.mxu0 0.0
    %715 = vmatpush1.msra.mxu0 0.0
    %716 = vmatprep.subr.mxu0 0.0
    %717 = vmatpush1.msra.mxu0 0.0
    %718 = vmatprep.subr.mxu0 0.0
    %719 = vmatpush1.msra.mxu0 0.0
    %720 = vmatprep.subr.mxu0 0.0
    %721 = vmatpush1.msra.mxu0 0.0
    %722 = vmatprep.subr.mxu0 0.0
    %723 = vmatpush1.msra.mxu0 %v185
    %724 = vmatprep.subr.mxu0 0.0
    %725 = vmatpush1.msra.mxu0 %v184
    %726 = vmatprep.subr.mxu0 0.0
    %727 = vmatpush1.msra.mxu0 %v183
    %728 = vmatprep.subr.mxu0 0.0
    %729 = vmatpush1.msra.mxu0 %v182
    %730 = vmatprep.subr.mxu0 0.0
    %731 = vmatpush2.msra.mxu0 0.0
    %732 = vmatprep.subr.mxu0 0.0
    %733 = vmatpush2.msra.mxu0 0.0
    %734 = vmatprep.subr.mxu0 0.0
    %735 = vmatpush2.msra.mxu0 0.0
    %736 = vmatprep.subr.mxu0 0.0
    %737 = vmatpush2.msra.mxu0 0.0
    %738 = vmatprep.subr.mxu0 0.0
    %739 = vmatpush2.msra.mxu0 0.0
    %740 = vmatprep.subr.mxu0 0.0
    %741 = vmatpush2.msra.mxu0 0.0
    %742 = vmatprep.subr.mxu0 0.0
    %743 = vmatpush2.msra.mxu0 0.0
    %744 = vmatprep.subr.mxu0 0.0
    %745 = vmatpush2.msra.mxu0 0.0
    %746 = vmatprep.subr.mxu0 0.0
    %747 = vmatpush2.msra.mxu0 0.0
    %748 = vmatprep.subr.mxu0 0.0
    %749 = vmatpush2.msra.mxu0 0.0
    %750 = vmatprep.subr.mxu0 0.0
    %751 = vmatpush2.msra.mxu0 0.0
    %752 = vmatprep.subr.mxu0 0.0
    %753 = vmatpush2.msra.mxu0 0.0
    %754 = vmatprep.subr.mxu0 0.0
    %755 = vmatpush2.msra.mxu0 0.0
    %756 = vmatprep.subr.mxu0 0.0
    %757 = vmatpush2.msra.mxu0 0.0
    %758 = vmatprep.subr.mxu0 0.0
    %759 = vmatpush2.msra.mxu0 0.0
    %760 = vmatprep.subr.mxu0 0.0
    %761 = vmatpush2.msra.mxu0 0.0
    %762 = vmatprep.mubr.f32.mxu0 0.0
    %763 = vmatmul.mubr.f32.gmra.mxu0 %v696
    %v764 = vpop.f32.mrf.mxu0
    %v765 = vadd.f32 0.0, %v764
    %v766 = vpop.f32.mrf.mxu0
    %767 = vdwg.mxu0
    %v768 = vadd.f32 %v692, %v765
    %v769 = vmul.f32 %v768, %v191
    %v770 = vtanh.pop %v769
    %v771 = vmul.f32 %v770, %v191
    %v772 = vadd.f32 %v771, %v192
    %v773 = vmul.f32 %v772, %v684
    %775 = vrot.lane.b32.xlu0 %v772, 64
    %v776 = vpop.permute.xlu0 %775
    %v778 = vmul.f32 %v772, %v776
    %780 = vrot.lane.b32.xlu0 %v778, 32
    %v781 = vpop.permute.xlu0 %780
    %v783 = vadd.f32 %v773, %v781
    %v784 = vtanh.pop %v783
    %786 = vrot.lane.b32.xlu0 %v784, 64
    %v787 = vpop.permute.xlu0 %786
    %v789 = vmul.f32 %v772, %v787
    %s790 = scalar_lea.vmem [#allocation2], 48
    %v791 = vld [vmem:[%s790] sm:$0xff]
    %793 = vrot.lane.b32.xlu0 %v789, 32
    %v794 = vpop.permute.xlu0 %793
    %v795 = vsel %vm44, %v794, 0
    %797 = vmatprep.subr.mxu0 0.0
    %798 = vmatpush1.msra.mxu0 0.0
    %799 = vmatprep.subr.mxu0 0.0
    %800 = vmatpush1.msra.mxu0 0.0
    %801 = vmatprep.subr.mxu0 0.0
    %802 = vmatpush1.msra.mxu0 0.0
    %803 = vmatprep.subr.mxu0 0.0
    %804 = vmatpush1.msra.mxu0 0.0
    %805 = vmatprep.subr.mxu0 0.0
    %806 = vmatpush1.msra.mxu0 0.0
    %807 = vmatprep.subr.mxu0 0.0
    %808 = vmatpush1.msra.mxu0 0.0
    %809 = vmatprep.subr.mxu0 0.0
    %810 = vmatpush1.msra.mxu0 0.0
    %811 = vmatprep.subr.mxu0 0.0
    %812 = vmatpush1.msra.mxu0 0.0
    %813 = vmatprep.subr.mxu0 0.0
    %814 = vmatpush1.msra.mxu0 0.0
    %815 = vmatprep.subr.mxu0 0.0
    %816 = vmatpush1.msra.mxu0 0.0
    %817 = vmatprep.subr.mxu0 0.0
    %818 = vmatpush1.msra.mxu0 0.0
    %819 = vmatprep.subr.mxu0 0.0
    %820 = vmatpush1.msra.mxu0 0.0
    %821 = vmatprep.subr.mxu0 0.0
    %822 = vmatpush1.msra.mxu0 %v185
    %823 = vmatprep.subr.mxu0 0.0
    %824 = vmatpush1.msra.mxu0 %v184
    %825 = vmatprep.subr.mxu0 0.0
    %826 = vmatpush1.msra.mxu0 %v183
    %827 = vmatprep.subr.mxu0 0.0
    %828 = vmatpush1.msra.mxu0 %v182
    %829 = vmatprep.subr.mxu0 0.0
    %830 = vmatpush2.msra.mxu0 0.0
    %831 = vmatprep.subr.mxu0 0.0
    %832 = vmatpush2.msra.mxu0 0.0
    %833 = vmatprep.subr.mxu0 0.0
    %834 = vmatpush2.msra.mxu0 0.0
    %835 = vmatprep.subr.mxu0 0.0
    %836 = vmatpush2.msra.mxu0 0.0
    %837 = vmatprep.subr.mxu0 0.0
    %838 = vmatpush2.msra.mxu0 0.0
    %839 = vmatprep.subr.mxu0 0.0
    %840 = vmatpush2.msra.mxu0 0.0
    %841 = vmatprep.subr.mxu0 0.0
    %842 = vmatpush2.msra.mxu0 0.0
    %843 = vmatprep.subr.mxu0 0.0
    %844 = vmatpush2.msra.mxu0 0.0
    %845 = vmatprep.subr.mxu0 0.0
    %846 = vmatpush2.msra.mxu0 0.0
    %847 = vmatprep.subr.mxu0 0.0
    %848 = vmatpush2.msra.mxu0 0.0
    %849 = vmatprep.subr.mxu0 0.0
    %850 = vmatpush2.msra.mxu0 0.0
    %851 = vmatprep.subr.mxu0 0.0
    %852 = vmatpush2.msra.mxu0 0.0
    %853 = vmatprep.subr.mxu0 0.0
    %854 = vmatpush2.msra.mxu0 0.0
    %855 = vmatprep.subr.mxu0 0.0
    %856 = vmatpush2.msra.mxu0 0.0
    %857 = vmatprep.subr.mxu0 0.0
    %858 = vmatpush2.msra.mxu0 0.0
    %859 = vmatprep.subr.mxu0 0.0
    %860 = vmatpush2.msra.mxu0 0.0
    %861 = vmatprep.mubr.f32.mxu0 0.0
    %862 = vmatmul.mubr.f32.gmra.mxu0 %v795
    %v863 = vpop.f32.mrf.mxu0
    %v864 = vadd.f32 0.0, %v863
    %v865 = vpop.f32.mrf.mxu0
    %866 = vdwg.mxu0
    %v867 = vadd.f32 %v791, %v864
    %v868 = vmul.f32 %v867, %v191
    %v869 = vtanh.pop %v868
    %v870 = vmul.f32 %v869, %v191
    %v871 = vadd.f32 %v870, %v192
    %v872 = vmul.f32 %v871, %v783
    %874 = vrot.lane.b32.xlu0 %v871, 64
    %v875 = vpop.permute.xlu0 %874
    %v877 = vmul.f32 %v871, %v875
    %879 = vrot.lane.b32.xlu0 %v877, 32
    %v880 = vpop.permute.xlu0 %879
    %v882 = vadd.f32 %v872, %v880
    %v883 = vtanh.pop %v882
    %885 = vrot.lane.b32.xlu0 %v883, 64
    %v886 = vpop.permute.xlu0 %885
    %v888 = vmul.f32 %v871, %v886
    %s889 = scalar_lea.vmem [#allocation2], 56
    %v890 = vld [vmem:[%s889] sm:$0xff]
    %892 = vrot.lane.b32.xlu0 %v888, 32
    %v893 = vpop.permute.xlu0 %892
    %v894 = vsel %vm44, %v893, 0
    %896 = vmatprep.subr.mxu0 0.0
    %897 = vmatpush1.msra.mxu0 0.0
    %898 = vmatprep.subr.mxu0 0.0
    %899 = vmatpush1.msra.mxu0 0.0
    %900 = vmatprep.subr.mxu0 0.0
    %901 = vmatpush1.msra.mxu0 0.0
    %902 = vmatprep.subr.mxu0 0.0
    %903 = vmatpush1.msra.mxu0 0.0
    %904 = vmatprep.subr.mxu0 0.0
    %905 = vmatpush1.msra.mxu0 0.0
    %906 = vmatprep.subr.mxu0 0.0
    %907 = vmatpush1.msra.mxu0 0.0
    %908 = vmatprep.subr.mxu0 0.0
    %909 = vmatpush1.msra.mxu0 0.0
    %910 = vmatprep.subr.mxu0 0.0
    %911 = vmatpush1.msra.mxu0 0.0
    %912 = vmatprep.subr.mxu0 0.0
    %913 = vmatpush1.msra.mxu0 0.0
    %914 = vmatprep.subr.mxu0 0.0
    %915 = vmatpush1.msra.mxu0 0.0
    %916 = vmatprep.subr.mxu0 0.0
    %917 = vmatpush1.msra.mxu0 0.0
    %918 = vmatprep.subr.mxu0 0.0
    %919 = vmatpush1.msra.mxu0 0.0
    %920 = vmatprep.subr.mxu0 0.0
    %921 = vmatpush1.msra.mxu0 %v185
    %922 = vmatprep.subr.mxu0 0.0
    %923 = vmatpush1.msra.mxu0 %v184
    %924 = vmatprep.subr.mxu0 0.0
    %925 = vmatpush1.msra.mxu0 %v183
    %926 = vmatprep.subr.mxu0 0.0
    %927 = vmatpush1.msra.mxu0 %v182
    %928 = vmatprep.subr.mxu0 0.0
    %929 = vmatpush2.msra.mxu0 0.0
    %930 = vmatprep.subr.mxu0 0.0
    %931 = vmatpush2.msra.mxu0 0.0
    %932 = vmatprep.subr.mxu0 0.0
    %933 = vmatpush2.msra.mxu0 0.0
    %934 = vmatprep.subr.mxu0 0.0
    %935 = vmatpush2.msra.mxu0 0.0
    %936 = vmatprep.subr.mxu0 0.0
    %937 = vmatpush2.msra.mxu0 0.0
    %938 = vmatprep.subr.mxu0 0.0
    %939 = vmatpush2.msra.mxu0 0.0
    %940 = vmatprep.subr.mxu0 0.0
    %941 = vmatpush2.msra.mxu0 0.0
    %942 = vmatprep.subr.mxu0 0.0
    %943 = vmatpush2.msra.mxu0 0.0
    %944 = vmatprep.subr.mxu0 0.0
    %945 = vmatpush2.msra.mxu0 0.0
    %946 = vmatprep.subr.mxu0 0.0
    %947 = vmatpush2.msra.mxu0 0.0
    %948 = vmatprep.subr.mxu0 0.0
    %949 = vmatpush2.msra.mxu0 0.0
    %950 = vmatprep.subr.mxu0 0.0
    %951 = vmatpush2.msra.mxu0 0.0
    %952 = vmatprep.subr.mxu0 0.0
    %953 = vmatpush2.msra.mxu0 0.0
    %954 = vmatprep.subr.mxu0 0.0
    %955 = vmatpush2.msra.mxu0 0.0
    %956 = vmatprep.subr.mxu0 0.0
    %957 = vmatpush2.msra.mxu0 0.0
    %958 = vmatprep.subr.mxu0 0.0
    %959 = vmatpush2.msra.mxu0 0.0
    %960 = vmatprep.mubr.f32.mxu0 0.0
    %961 = vmatmul.mubr.f32.gmra.mxu0 %v894
    %v962 = vpop.f32.mrf.mxu0
    %v963 = vadd.f32 0.0, %v962
    %v964 = vpop.f32.mrf.mxu0
    %965 = vdwg.mxu0
    %v966 = vadd.f32 %v890, %v963
    %v967 = vmul.f32 %v966, %v191
    %v968 = vtanh.pop %v967
    %v969 = vmul.f32 %v968, %v191
    %v970 = vadd.f32 %v969, %v192
    %v971 = vmul.f32 %v970, %v882
    %973 = vrot.lane.b32.xlu0 %v970, 64
    %v974 = vpop.permute.xlu0 %973
    %v976 = vmul.f32 %v970, %v974
    %978 = vrot.lane.b32.xlu0 %v976, 32
    %v979 = vpop.permute.xlu0 %978
    %v981 = vadd.f32 %v971, %v979
    %v982 = vtanh.pop %v981
    %984 = vrot.lane.b32.xlu0 %v982, 64
    %v985 = vpop.permute.xlu0 %984
    %v987 = vmul.f32 %v970, %v985
    %989 = vrot.lane.b32.xlu0 %v987, 32
    %v990 = vpop.permute.xlu0 %989
    %992 = vst.msk [vmem:[#allocation3] sm:$0xff] %vm44, %v990
    %994 = vrot.lane.b32.xlu0 %v981, 96
    %v995 = vpop.permute.xlu0 %994
    %997 = vst.msk [vmem:[#allocation4] sm:$0xff] %vm44, %v995
    %998 = vst.msk [vmem:[#allocation5] sm:$0xff] %vm44, %v990
    // Predicated region
    $region22: #{tpu_custom_call.1} parent=1 // pred_check
      _
    $region23: #{tpu_custom_call.1} parent=1 // pred_check_branch
      %1000 = sbr.rel (0) target = $region25
    $region24: #{tpu_custom_call.1} parent=1 // pred_region
      %s1002 = ssub.s32 128, 128
      %1003 = vsyncadd [#allocation6], %s1002
      %s1005 = sshll.u32 [#allocation5], 4
      %s1006 = int_to_ptr.vmem [resolvable:$true] %s1005
      %1008 = dma.vmem_to_hbm [thread:$0]  %s1006, 128, %s4, [#allocation6]
    $region25: #{tpu_custom_call.1} parent=1 // pred_fallthru
      _
    // Predicated region
    $region26: #{tpu_custom_call.1} parent=1 // pred_check
      _
    $region27: #{tpu_custom_call.1} parent=1 // pred_check_branch
      %1010 = sbr.rel (0) target = $region29
    $region28: #{tpu_custom_call.1} parent=1 // pred_region
      %1011 = dma.done [#allocation6], 128
    $region29: #{tpu_custom_call.1} parent=1 // pred_fallthru
      _
    %1012 = vsyncpa [#allocation6], 1

</llo_original>
